<compile_context>
chip_gen: v6e
topology: v6e:2x2x1
jax: 0.10.0
libtpu: 0.0.40
codegen_flags: <defaults>
</compile_context>

<pallas_src>
import functools

import jax
import jax.numpy as jnp
from jax.experimental import pallas as pl
from jax.experimental.pallas import tpu as pltpu


def _round_up(x, m):
    return ((x + m - 1) // m) * m


def _vmem_limit_bytes():
    phys = 64 * 1024 * 1024
    try:
        phys = pltpu.get_tpu_info().vmem_capacity_bytes
    except Exception:
        pass
    # Leave pipeline headroom: v5e/v6e (128 MiB) -> 96 MiB, v7x (64 MiB) -> 48 MiB.
    return int(min(phys * 3 // 4, 96 * 1024 * 1024))


# ---------------------------------------------------------------------------
# Kernel
# ---------------------------------------------------------------------------
def _critique_kernel(hs_ref, ps_ref,
                     w1h_ref, w1p_ref, b1_ref, w2_ref, b2_ref,
                     out_ref):
    # Layer 1 (both heads fused into one weight matrix), hidden_states part on
    # the MXU: bf16 operands, f32 accumulate.
    h = jnp.dot(hs_ref[...].astype(jnp.bfloat16), w1h_ref[...],
                preferred_element_type=jnp.float32)

    # Principle-score contribution: contraction depth ~num_principles is far
    # too shallow for the MXU -> unrolled VPU broadcast FMAs instead.
    ps = ps_ref[...]                                   # [TB, P]  f32
    w1p = w1p_ref[...]                                 # [P, HH_PAD] f32
    num_p = w1p.shape[0]
    if num_p <= 16:
        for j in range(num_p):
            h = h + ps[:, j:j + 1] * w1p[j:j + 1, :]
    else:
        h = h + jnp.dot(ps, w1p, preferred_element_type=jnp.float32)

    h = jnp.maximum(h + b1_ref[...], 0.0)              # bias + ReLU

    # Layer 2: block-diagonal fused W2 -> single lane-dense [TB, OUT_PAD] slab.
    logits = jnp.dot(h.astype(jnp.bfloat16), w2_ref[...],
                     preferred_element_type=jnp.float32) + b2_ref[...]

    # Numerically-safe sigmoid: clamp, then exp (EUP) + approx reciprocal (EUP).
    logits = jnp.clip(logits, -30.0, 30.0)
    out_ref[...] = pl.reciprocal(1.0 + jnp.exp(-logits), approx=True)


# ---------------------------------------------------------------------------
# One-time parameter packing (outside the hot path)
# ---------------------------------------------------------------------------
def pack_params(params, hidden_size, num_principles):
    """Fuse the two heads' weights, pad to MXU-friendly shapes, cast to bf16."""
    w1v, b1v = params["w1v"], params["b1v"]      # [D, Hh], [1, Hh]
    w2v, b2v = params["w2v"], params["b2v"]      # [Hh, P], [1, P]
    w1c, b1c = params["w1c"], params["b1c"]      # [D, Hh], [1, Hh]
    w2c, b2c = params["w2c"], params["b2c"]      # [Hh, 1], [1, 1]

    H, P = hidden_size, num_principles
    D, Hh = w1v.shape
    assert D == H + P, "layer-1 fan-in must be hidden_size + num_principles"
    assert w1c.shape == (D, Hh), "both heads must share the same intermediate width"
    assert w2v.shape == (Hh, P) and w2c.shape == (Hh, 1)

    H_PAD = _round_up(H, 128)                    # lane-dense hidden_states width
    HH = 2 * Hh
    HH_PAD = _round_up(HH, 256)                  # 256-wide MXU on v6e/v7x
    OUT = P + 1
    OUT_PAD = _round_up(OUT, 128)                # lane-dense fused output width

    # Layer-1 fusion: [w1v | w1c] on the output axis, split rows so the kernel
    # consumes hidden_states and principle scores separately (no HBM concat).
    w1 = jnp.concatenate([w1v, w1c], axis=1)                       # [D, 2Hh]
    w1 = jnp.pad(w1, ((0, 0), (0, HH_PAD - HH)))                   # lane pad
    w1h = jnp.pad(w1[:H, :], ((0, H_PAD - H), (0, 0)))             # [H_PAD, HH_PAD]
    w1p = w1[H:, :]                                                # [P, HH_PAD]
    b1 = jnp.pad(jnp.concatenate([b1v, b1c], axis=1),
                 ((0, 0), (0, HH_PAD - HH)))                       # [1, HH_PAD]

    # Layer-2 fusion: block-diagonal, lane-dense output (cols 0..P-1 = viol,
    # col P = confidence, remaining lanes zero -> discarded after the kernel).
    w2 = jnp.zeros((HH_PAD, OUT_PAD), jnp.float32)
    w2 = w2.at[:Hh, :P].set(w2v)
    w2 = w2.at[Hh:HH, P:OUT].set(w2c)
    b2 = jnp.zeros((1, OUT_PAD), jnp.float32)
    b2 = b2.at[:, :P].set(b2v)
    b2 = b2.at[:, P:OUT].set(b2c)

    return dict(
        w1h=w1h.astype(jnp.bfloat16),            # big matmul weights in bf16
        w1p=w1p.astype(jnp.float32),             # tiny, used on the VPU -> f32
        b1=b1.astype(jnp.float32),
        w2=w2.astype(jnp.bfloat16),
        b2=b2.astype(jnp.float32),
    )


# ---------------------------------------------------------------------------
# Wrapper
# ---------------------------------------------------------------------------
@functools.partial(jax.jit, static_argnames=("batch_tile",))
def _critique_head_impl(hidden_states, ps, packed, *, batch_tile=512):
    B, H = hidden_states.shape
    P = ps.shape[-1]                              # static
    H_PAD, HH_PAD = packed["w1h"].shape           # static
    OUT_PAD = packed["w2"].shape[1]               # static
    assert packed["w1p"].shape[0] == P, "principle width mismatch with packed params"

    # Batch tiling: sublane-aligned, and >=2 grid steps when there is enough
    # work so v7x's two TensorCores split the batch and DMA pipelines.
    B_pad = _round_up(B, 8)
    TB = min(batch_tile, B_pad)
    if B_pad // TB < 2 and B_pad >= 16:
        TB = _round_up(pl.cdiv(B_pad, 2), 8)
    num_blocks = pl.cdiv(B_pad, TB)
    B_full = num_blocks * TB

    hs = hidden_states
    if B_full != B or H_PAD != H:
        hs = jnp.pad(hs, ((0, B_full - B), (0, H_PAD - H)))
    if B_full != B:
        ps = jnp.pad(ps, ((0, B_full - B), (0, 0)))

    row = lambda c: pl.BlockSpec((TB, c), lambda i: (i, 0))
    # Constant-index weights: single-buffered (double-buffering them only
    # doubles resident VMEM and never hides any DMA).
    const = lambda s: pl.BlockSpec(s, lambda i: (0, 0),
                                   pipeline_mode=pl.Buffered(1))

    flops = 2 * B_full * HH_PAD * (H_PAD + P + OUT_PAD)
    transcendentals = B_full * OUT_PAD
    bytes_accessed = int(
        hs.size * 4 + ps.size * 4 + B_full * OUT_PAD * 4
        + sum(int(packed[k].size) * packed[k].dtype.itemsize
              for k in ("w1h", "w1p", "b1", "w2", "b2")))

    out = pl.pallas_call(
        _critique_kernel,
        out_shape=jax.ShapeDtypeStruct((B_full, OUT_PAD), jnp.float32),
        grid=(num_blocks,),
        in_specs=[
            row(H_PAD),                       # hidden_states (lane-padded)
            row(P),                           # principle scores
            const(packed["w1h"].shape),       # [H_PAD, HH_PAD] bf16
            const(packed["w1p"].shape),       # [P, HH_PAD]     f32
            const(packed["b1"].shape),        # [1, HH_PAD]     f32
            const(packed["w2"].shape),        # [HH_PAD, OUT_PAD] bf16
            const(packed["b2"].shape),        # [1, OUT_PAD]    f32
        ],
        out_specs=row(OUT_PAD),
        compiler_params=pltpu.CompilerParams(
            dimension_semantics=("parallel",),        # batch split across TCs
            vmem_limit_bytes=_vmem_limit_bytes(),
        ),
        cost_estimate=pl.CostEstimate(
            flops=flops, transcendentals=transcendentals,
            bytes_accessed=bytes_accessed),
    )(hs, ps,
      packed["w1h"], packed["w1p"], packed["b1"], packed["w2"], packed["b2"])

    # Static-shape slicing of the fused lane-dense slab back into module outputs.
    return {"violations": out[:B, :P], "confidence": out[:B, P:P + 1]}


def critique_head(hidden_states, principle_scores, packed, *, batch_tile=512):
    """hidden_states: [B, H] f32; principle_scores: dict of [B, p_i] f32.
    Dict *insertion* order defines the principle ordering, as in the torch
    module — so the concat happens outside jit (jit pytrees sort dict keys)."""
    ps = jnp.concatenate(list(principle_scores.values()), axis=-1)
    return _critique_head_impl(hidden_states, ps, packed, batch_tile=batch_tile)


# ---------------------------------------------------------------------------
# Deterministic synthetic init (torch Linear is (out,in); stored transposed)
# ---------------------------------------------------------------------------
def init_params(key, hidden_size, num_principles):
    D = hidden_size + num_principles
    Hh = hidden_size // 2
    ks = jax.random.split(key, 8)

    def lin(kw, kb, fan_in, fan_out):
        bound = 1.0 / jnp.sqrt(fan_in)
        w = jax.random.uniform(kw, (fan_in, fan_out), jnp.float32, -bound, bound)
        b = jax.random.uniform(kb, (1, fan_out), jnp.float32, -bound, bound)
        return w, b

    w1v, b1v = lin(ks[0], ks[1], D, Hh)
    w2v, b2v = lin(ks[2], ks[3], Hh, num_principles)
    w1c, b1c = lin(ks[4], ks[5], D, Hh)
    w2c, b2c = lin(ks[6], ks[7], Hh, 1)
    return dict(w1v=w1v, b1v=b1v, w2v=w2v, b2v=b2v,
                w1c=w1c, b1c=b1c, w2c=w2c, b2c=b2c)


if __name__ == "__main__":
    hidden_size = 32
    num_principles = 4
    batch = 8

    key = jax.random.PRNGKey(0)
    k_param, k_h, k_p1, k_p2 = jax.random.split(key, 4)

    params = init_params(k_param, hidden_size, num_principles)
    packed = pack_params(params, hidden_size, num_principles)

    hidden_states = jax.random.normal(k_h, (batch, hidden_size), jnp.float32)
    principle_scores = {
        "harmlessness": jax.random.uniform(k_p1, (batch, 2), jnp.float32),
        "honesty": jax.random.uniform(k_p2, (batch, 2), jnp.float32),
    }

    out = critique_head(hidden_states, principle_scores, packed)
    jax.block_until_ready(out)

    # Plain-JAX f32 reference (exact sigmoid).
    pt = jnp.concatenate(list(principle_scores.values()), axis=-1)
    x = jnp.concatenate([hidden_states, pt], axis=-1)
    hv = jnp.maximum(x @ params["w1v"] + params["b1v"], 0.0)
    viol_ref = jax.nn.sigmoid(hv @ params["w2v"] + params["b2v"])
    hc = jnp.maximum(x @ params["w1c"] + params["b1c"], 0.0)
    conf_ref = jax.nn.sigmoid(hc @ params["w2c"] + params["b2c"])

    assert out["violations"].shape == (batch, num_principles)
    assert out["confidence"].shape == (batch, 1)
    # bf16 weights/activations on the MXU + approx reciprocal -> ~1e-3 level error.
    assert jnp.allclose(out["violations"], viol_ref, atol=1e-2)
    assert jnp.allclose(out["confidence"], conf_ref, atol=1e-2)

    print("KERNEL_OK")
</pallas_src>

<mosaic_0001>
module attributes {stable_mosaic.version = 11 : i64} {
  func.func @_critique_kernel(%arg0: i32, %arg1: memref<8x128xf32, #tpu.memory_space<vmem>>, %arg2: memref<8x4xf32, #tpu.memory_space<vmem>>, %arg3: memref<128x256xbf16, #tpu.memory_space<vmem>>, %arg4: memref<4x256xf32, #tpu.memory_space<vmem>>, %arg5: memref<1x256xf32, #tpu.memory_space<vmem>>, %arg6: memref<256x128xbf16, #tpu.memory_space<vmem>>, %arg7: memref<1x128xf32, #tpu.memory_space<vmem>>, %arg8: memref<8x128xf32, #tpu.memory_space<vmem>>) attributes {dimension_semantics = [#tpu.dimension_semantics<parallel>], iteration_bounds = array<i64: 1>, scalar_prefetch = 0 : i64, scratch_operands = 0 : i64, tpu.core_type = #tpu.core_type<tc>, window_params = [{transform_indices = @transform_0, window_bounds = array<i64: 8, 128>}, {transform_indices = @transform_1, window_bounds = array<i64: 8, 4>}, {pipeline_mode = #tpu.pipeline_mode<synchronous>, transform_indices = @transform_2, window_bounds = array<i64: 128, 256>}, {pipeline_mode = #tpu.pipeline_mode<synchronous>, transform_indices = @transform_3, window_bounds = array<i64: 4, 256>}, {pipeline_mode = #tpu.pipeline_mode<synchronous>, transform_indices = @transform_4, window_bounds = array<i64: 1, 256>}, {pipeline_mode = #tpu.pipeline_mode<synchronous>, transform_indices = @transform_5, window_bounds = array<i64: 256, 128>}, {pipeline_mode = #tpu.pipeline_mode<synchronous>, transform_indices = @transform_6, window_bounds = array<i64: 1, 128>}, {transform_indices = @transform_7, window_bounds = array<i64: 8, 128>}]} {
    %c0 = arith.constant 0 : index
    %c0_0 = arith.constant 0 : index
    %0 = vector.load %arg1[%c0, %c0_0] : memref<8x128xf32, #tpu.memory_space<vmem>>, vector<8x128xf32>
    %1 = arith.truncf %0 : vector<8x128xf32> to vector<8x128xbf16>
    %c0_1 = arith.constant 0 : index
    %c0_2 = arith.constant 0 : index
    %2 = vector.load %arg3[%c0_1, %c0_2] : memref<128x256xbf16, #tpu.memory_space<vmem>>, vector<128x256xbf16>
    %cst = arith.constant dense<0.000000e+00> : vector<8x256xf32>
    %3 = tpu.matmul %1, %2, %cst {dimension_numbers = #tpu.dot_dimension_numbers<[1], [0], [0], [1], [0, 0, 1, 1], [], []>} : vector<8x128xbf16>, vector<128x256xbf16>, vector<8x256xf32> -> vector<8x256xf32>
    %c0_3 = arith.constant 0 : index
    %c0_4 = arith.constant 0 : index
    %4 = vector.load %arg2[%c0_3, %c0_4] : memref<8x4xf32, #tpu.memory_space<vmem>>, vector<8x4xf32>
    %c0_5 = arith.constant 0 : index
    %c0_6 = arith.constant 0 : index
    %5 = vector.load %arg4[%c0_5, %c0_6] : memref<4x256xf32, #tpu.memory_space<vmem>>, vector<4x256xf32>
    %6 = vector.extract_strided_slice %4 {offsets = [0, 0], sizes = [8, 1], strides = [1, 1]} : vector<8x4xf32> to vector<8x1xf32>
    %7 = vector.extract_strided_slice %5 {offsets = [0, 0], sizes = [1, 256], strides = [1, 1]} : vector<4x256xf32> to vector<1x256xf32>
    %8 = vector.broadcast %6 : vector<8x1xf32> to vector<8x256xf32>
    %9 = vector.broadcast %7 : vector<1x256xf32> to vector<8x256xf32>
    %10 = arith.mulf %8, %9 : vector<8x256xf32>
    %11 = arith.addf %3, %10 : vector<8x256xf32>
    %12 = vector.extract_strided_slice %4 {offsets = [0, 1], sizes = [8, 1], strides = [1, 1]} : vector<8x4xf32> to vector<8x1xf32>
    %13 = vector.extract_strided_slice %5 {offsets = [1, 0], sizes = [1, 256], strides = [1, 1]} : vector<4x256xf32> to vector<1x256xf32>
    %14 = vector.broadcast %12 : vector<8x1xf32> to vector<8x256xf32>
    %15 = vector.broadcast %13 : vector<1x256xf32> to vector<8x256xf32>
    %16 = arith.mulf %14, %15 : vector<8x256xf32>
    %17 = arith.addf %11, %16 : vector<8x256xf32>
    %18 = vector.extract_strided_slice %4 {offsets = [0, 2], sizes = [8, 1], strides = [1, 1]} : vector<8x4xf32> to vector<8x1xf32>
    %19 = vector.extract_strided_slice %5 {offsets = [2, 0], sizes = [1, 256], strides = [1, 1]} : vector<4x256xf32> to vector<1x256xf32>
    %20 = vector.broadcast %18 : vector<8x1xf32> to vector<8x256xf32>
    %21 = vector.broadcast %19 : vector<1x256xf32> to vector<8x256xf32>
    %22 = arith.mulf %20, %21 : vector<8x256xf32>
    %23 = arith.addf %17, %22 : vector<8x256xf32>
    %24 = vector.extract_strided_slice %4 {offsets = [0, 3], sizes = [8, 1], strides = [1, 1]} : vector<8x4xf32> to vector<8x1xf32>
    %25 = vector.extract_strided_slice %5 {offsets = [3, 0], sizes = [1, 256], strides = [1, 1]} : vector<4x256xf32> to vector<1x256xf32>
    %26 = vector.broadcast %24 : vector<8x1xf32> to vector<8x256xf32>
    %27 = vector.broadcast %25 : vector<1x256xf32> to vector<8x256xf32>
    %28 = arith.mulf %26, %27 : vector<8x256xf32>
    %29 = arith.addf %23, %28 : vector<8x256xf32>
    %c0_7 = arith.constant 0 : index
    %c0_8 = arith.constant 0 : index
    %30 = vector.load %arg5[%c0_7, %c0_8] : memref<1x256xf32, #tpu.memory_space<vmem>>, vector<1x256xf32>
    %31 = vector.broadcast %30 : vector<1x256xf32> to vector<8x256xf32>
    %32 = arith.addf %29, %31 : vector<8x256xf32>
    %cst_9 = arith.constant 0.000000e+00 : f32
    %33 = vector.broadcast %cst_9 : f32 to vector<8x256xf32>
    %34 = arith.maximumf %32, %33 : vector<8x256xf32>
    %35 = arith.truncf %34 : vector<8x256xf32> to vector<8x256xbf16>
    %c0_10 = arith.constant 0 : index
    %c0_11 = arith.constant 0 : index
    %36 = vector.load %arg6[%c0_10, %c0_11] : memref<256x128xbf16, #tpu.memory_space<vmem>>, vector<256x128xbf16>
    %cst_12 = arith.constant dense<0.000000e+00> : vector<8x128xf32>
    %37 = tpu.matmul %35, %36, %cst_12 {dimension_numbers = #tpu.dot_dimension_numbers<[1], [0], [0], [1], [0, 0, 1, 1], [], []>} : vector<8x256xbf16>, vector<256x128xbf16>, vector<8x128xf32> -> vector<8x128xf32>
    %c0_13 = arith.constant 0 : index
    %c0_14 = arith.constant 0 : index
    %38 = vector.load %arg7[%c0_13, %c0_14] : memref<1x128xf32, #tpu.memory_space<vmem>>, vector<1x128xf32>
    %39 = vector.broadcast %38 : vector<1x128xf32> to vector<8x128xf32>
    %40 = arith.addf %37, %39 : vector<8x128xf32>
    %cst_15 = arith.constant -3.000000e+01 : f32
    %cst_16 = arith.constant 3.000000e+01 : f32
    %41 = vector.broadcast %cst_15 : f32 to vector<8x128xf32>
    %42 = arith.maximumf %41, %40 : vector<8x128xf32>
    %43 = vector.broadcast %cst_16 : f32 to vector<8x128xf32>
    %44 = arith.minimumf %43, %42 : vector<8x128xf32>
    %cst_17 = arith.constant 0.000000e+00 : f32
    %45 = vector.broadcast %cst_17 : f32 to vector<8x128xf32>
    %46 = arith.subf %45, %44 : vector<8x128xf32>
    %47 = math.exp %46 : vector<8x128xf32>
    %cst_18 = arith.constant 1.000000e+00 : f32
    %48 = vector.broadcast %cst_18 : f32 to vector<8x128xf32>
    %49 = arith.addf %48, %47 : vector<8x128xf32>
    %50 = tpu.reciprocal %49 {approx = true} : vector<8x128xf32> -> vector<8x128xf32>
    %c0_19 = arith.constant 0 : index
    %c0_20 = arith.constant 0 : index
    %51 = vector.load %arg8[%c0_19, %c0_20] : memref<8x128xf32, #tpu.memory_space<vmem>>, vector<8x128xf32>
    tpu.vector_store %arg8[%c0_19, %c0_20], %50 {strides = array<i32>} : memref<8x128xf32, #tpu.memory_space<vmem>>, vector<8x128xf32>,
    return
  }
  func.func @transform_0(%arg0: i32) -> (i32, i32) {
    %c0_i32 = arith.constant 0 : i32
    %c0_i32_0 = arith.constant 0 : i32
    return %arg0, %c0_i32 : i32, i32
  }
  func.func @transform_1(%arg0: i32) -> (i32, i32) {
    %c0_i32 = arith.constant 0 : i32
    %c0_i32_0 = arith.constant 0 : i32
    return %arg0, %c0_i32 : i32, i32
  }
  func.func @transform_2(%arg0: i32) -> (i32, i32) {
    %c0_i32 = arith.constant 0 : i32
    %c0_i32_0 = arith.constant 0 : i32
    %c0_i32_1 = arith.constant 0 : i32
    return %c0_i32, %c0_i32_0 : i32, i32
  }
  func.func @transform_3(%arg0: i32) -> (i32, i32) {
    %c0_i32 = arith.constant 0 : i32
    %c0_i32_0 = arith.constant 0 : i32
    %c0_i32_1 = arith.constant 0 : i32
    return %c0_i32, %c0_i32_0 : i32, i32
  }
  func.func @transform_4(%arg0: i32) -> (i32, i32) {
    %c0_i32 = arith.constant 0 : i32
    %c0_i32_0 = arith.constant 0 : i32
    %c0_i32_1 = arith.constant 0 : i32
    return %c0_i32, %c0_i32_0 : i32, i32
  }
  func.func @transform_5(%arg0: i32) -> (i32, i32) {
    %c0_i32 = arith.constant 0 : i32
    %c0_i32_0 = arith.constant 0 : i32
    %c0_i32_1 = arith.constant 0 : i32
    return %c0_i32, %c0_i32_0 : i32, i32
  }
  func.func @transform_6(%arg0: i32) -> (i32, i32) {
    %c0_i32 = arith.constant 0 : i32
    %c0_i32_0 = arith.constant 0 : i32
    %c0_i32_1 = arith.constant 0 : i32
    return %c0_i32, %c0_i32_0 : i32, i32
  }
  func.func @transform_7(%arg0: i32) -> (i32, i32) {
    %c0_i32 = arith.constant 0 : i32
    %c0_i32_0 = arith.constant 0 : i32
    return %arg0, %c0_i32 : i32, i32
  }
}

</mosaic_0001>

<llo_original>
// kernel: _critique_head_impl.1
$region0: #{_critique_head_impl.1}
  #allocation0 [shape = 'u32[]', space=smem, size = 0x4, offset = 0x4, fixed_abs, tag = 'smem constant byte address 0x4 - core index']
  #allocation1 [shape = 'u32[144,128]{1,0:T(1,128)}', space=vmem, size = 0x12000, scoped, tag = 'internal scratch']
  %s0 = inlined_call_operand.vmem [shape: f32[8,128], index: 0, kind: input, shape index: {}]
  %s1 = inlined_call_operand.vmem [shape: f32[8,4], index: 1, kind: input, shape index: {}]
  %s2 = inlined_call_operand.hbm [shape: bf16[128,256], index: 2, kind: input, shape index: {}]
  %s3 = inlined_call_operand.vmem [shape: f32[4,256], index: 3, kind: input, shape index: {}]
  %s4 = inlined_call_operand.vmem [shape: f32[1,256], index: 4, kind: input, shape index: {}]
  %s5 = inlined_call_operand.hbm [shape: bf16[256,128], index: 5, kind: input, shape index: {}]
  %s6 = inlined_call_operand.vmem [shape: f32[1,128], index: 6, kind: input, shape index: {}]
  %s7 = inlined_call_operand.vmem [shape: f32[8,128], index: 7, kind: output, shape index: {}]
  %s8 = sld [smem:[#allocation0]]
  $region46: #{_critique_head_impl.1} parent=0
    _
  %s10 = ssub.s32 1, %s8
  %s11 = scalar_select 0, %s10, %s8
  $region1: #{_critique_head_impl.1} parent=0
    #allocation2 [shape = 'u8[65536]{0}', space=vmem, size = 0x10000, scoped, tag = 'input window, operand 2, single buffered']
    #allocation3 [shape = 's32[1]{0}', space=sflag, size = 0x4, scoped, tag = 'scoped memory for _critique_head_impl.1']
    #allocation4 [shape = 'u8[65536]{0}', space=vmem, size = 0x10000, scoped, tag = 'input window, operand 5, single buffered']
    #allocation5 [shape = 's32[1]{0}', space=sflag, size = 0x4, scoped, tag = 'scoped memory for _critique_head_impl.1']
    %12 = vsyncpa [#allocation3], 0
    %13 = vsyncpa [#allocation5], 0
    // Predicated region
    $region2: #{_critique_head_impl.1} parent=1 // pred_check
      _
    $region3: #{_critique_head_impl.1} parent=1 // pred_check_branch
      %15 = sbr.rel (0) target = $region5
    $region4: #{_critique_head_impl.1} parent=1 // pred_region
      _
    $region5: #{_critique_head_impl.1} parent=1 // pred_fallthru
      _
    // Predicated region
    $region6: #{_critique_head_impl.1} parent=1 // pred_check
      _
    $region7: #{_critique_head_impl.1} parent=1 // pred_check_branch
      %17 = sbr.rel (0) target = $region9
    $region8: #{_critique_head_impl.1} parent=1 // pred_region
      _
    $region9: #{_critique_head_impl.1} parent=1 // pred_fallthru
      _
    // Predicated region
    $region10: #{_critique_head_impl.1} parent=1 // pred_check
      _
    $region11: #{_critique_head_impl.1} parent=1 // pred_check_branch
      %19 = sbr.rel (0) target = $region13
    $region12: #{_critique_head_impl.1} parent=1 // pred_region
      %s21 = ssub.s32 2048, 2048
      %22 = vsyncadd [#allocation3], %s21
      %s23 = sshll.u32 [#allocation2], 4
      %s24 = int_to_ptr.vmem [resolvable:$true] %s23
      %29 = dma.hbm_to_vmem [thread:$0]  %s2, 2048, %s24, [#allocation3], 128, 128, 8
    $region13: #{_critique_head_impl.1} parent=1 // pred_fallthru
      _
    // Predicated region
    $region14: #{_critique_head_impl.1} parent=1 // pred_check
      _
    $region15: #{_critique_head_impl.1} parent=1 // pred_check_branch
      %31 = sbr.rel (0) target = $region17
    $region16: #{_critique_head_impl.1} parent=1 // pred_region
      _
    $region17: #{_critique_head_impl.1} parent=1 // pred_fallthru
      _
    // Predicated region
    $region18: #{_critique_head_impl.1} parent=1 // pred_check
      _
    $region19: #{_critique_head_impl.1} parent=1 // pred_check_branch
      %33 = sbr.rel (0) target = $region21
    $region20: #{_critique_head_impl.1} parent=1 // pred_region
      _
    $region21: #{_critique_head_impl.1} parent=1 // pred_fallthru
      _
    // Predicated region
    $region22: #{_critique_head_impl.1} parent=1 // pred_check
      _
    $region23: #{_critique_head_impl.1} parent=1 // pred_check_branch
      %35 = sbr.rel (0) target = $region25
    $region24: #{_critique_head_impl.1} parent=1 // pred_region
      %s37 = ssub.s32 2048, 2048
      %38 = vsyncadd [#allocation5], %s37
      %s39 = sshll.u32 [#allocation4], 4
      %s40 = int_to_ptr.vmem [resolvable:$true] %s39
      %45 = dma.hbm_to_vmem [thread:$0]  %s5, 2048, %s40, [#allocation5], 64, 64, 4
    $region25: #{_critique_head_impl.1} parent=1 // pred_fallthru
      _
    // Predicated region
    $region26: #{_critique_head_impl.1} parent=1 // pred_check
      _
    $region27: #{_critique_head_impl.1} parent=1 // pred_check_branch
      %47 = sbr.rel (0) target = $region29
    $region28: #{_critique_head_impl.1} parent=1 // pred_region
      _
    $region29: #{_critique_head_impl.1} parent=1 // pred_fallthru
      _
    // Predicated region
    $region30: #{_critique_head_impl.1} parent=1 // pred_check
      _
    $region31: #{_critique_head_impl.1} parent=1 // pred_check_branch
      %49 = sbr.rel (0) target = $region33
    $region32: #{_critique_head_impl.1} parent=1 // pred_region
      %50 = dma.done [#allocation3], 2048
    $region33: #{_critique_head_impl.1} parent=1 // pred_fallthru
      _
    // Predicated region
    $region34: #{_critique_head_impl.1} parent=1 // pred_check
      _
    $region35: #{_critique_head_impl.1} parent=1 // pred_check_branch
      %52 = sbr.rel (0) target = $region37
    $region36: #{_critique_head_impl.1} parent=1 // pred_region
      %53 = dma.done [#allocation5], 2048
    $region37: #{_critique_head_impl.1} parent=1 // pred_fallthru
      _
    %v55 = vld [vmem:[%s0] sm:$0xff]
    %v56 = vpack.c.bf16 %v55, %v55
    %v57 = vld [vmem:[#allocation2] sm:$0xff]
    %v58 = vld [vmem:[#allocation2 + $0x8] sm:$0xff]
    %v59 = vld [vmem:[#allocation2 + $0x10] sm:$0xff]
    %v60 = vld [vmem:[#allocation2 + $0x18] sm:$0xff]
    %v61 = vld [vmem:[#allocation2 + $0x20] sm:$0xff]
    %v62 = vld [vmem:[#allocation2 + $0x28] sm:$0xff]
    %v63 = vld [vmem:[#allocation2 + $0x30] sm:$0xff]
    %v64 = vld [vmem:[#allocation2 + $0x38] sm:$0xff]
    %v65 = vld [vmem:[#allocation2 + $0x40] sm:$0xff]
    %v66 = vld [vmem:[#allocation2 + $0x48] sm:$0xff]
    %v67 = vld [vmem:[#allocation2 + $0x50] sm:$0xff]
    %v68 = vld [vmem:[#allocation2 + $0x58] sm:$0xff]
    %v69 = vld [vmem:[#allocation2 + $0x60] sm:$0xff]
    %v70 = vld [vmem:[#allocation2 + $0x68] sm:$0xff]
    %v71 = vld [vmem:[#allocation2 + $0x70] sm:$0xff]
    %v72 = vld [vmem:[#allocation2 + $0x78] sm:$0xff]
    %v73 = vld [vmem:[%s1] sm:$0xff]
    %v74 = vld [vmem:[%s3] sm:$0xff]
    %76 = vset.pattern.permute.xlu0 0
    %77 = vperm.xlu0 %76, %v73
    %v78 = vpop.permute.xlu0 %77
    %v81 = vlaneseq
    %v82 = vshrl.u32 %v81, 7
    %v83 = vsub.s32 0, %v82
    %v84 = vrot.slane %v74, %v83
    %v85 = vlaneseq
    %v86 = vshrl.u32 %v85, 7
    %v87 = vsub.s32 4, %v86
    %v88 = vrot.slane %v74, %v87
    %v91 = vlaneseq
    %v92 = vshrl.u32 %v91, 7
    %v93 = vsub.s32 0, %v92
    %v94 = vrot.slane %v84, %v93
    %v95 = vlaneseq
    %v96 = vshrl.u32 %v95, 7
    %v97 = vsub.s32 0, %v96
    %v98 = vrot.slane %v88, %v97
    %v99 = vmul.f32 %v78, %v94
    %v100 = vmul.f32 %v78, %v98
    %v117 = vunpack.c.l.b16 %v57
    %v118 = vunpack.c.h.b16 %v57
    %v119 = vunpack.c.l.b16 %v58
    %v120 = vunpack.c.h.b16 %v58
    %v121 = vunpack.c.l.b16 %v59
    %v122 = vunpack.c.h.b16 %v59
    %v123 = vunpack.c.l.b16 %v60
    %v124 = vunpack.c.h.b16 %v60
    %v125 = vunpack.c.l.b16 %v61
    %v126 = vunpack.c.h.b16 %v61
    %v127 = vunpack.c.l.b16 %v62
    %v128 = vunpack.c.h.b16 %v62
    %v129 = vunpack.c.l.b16 %v63
    %v130 = vunpack.c.h.b16 %v63
    %v131 = vunpack.c.l.b16 %v64
    %v132 = vunpack.c.h.b16 %v64
    %v133 = vunpack.c.l.b16 %v65
    %v134 = vunpack.c.h.b16 %v65
    %v135 = vunpack.c.l.b16 %v66
    %v136 = vunpack.c.h.b16 %v66
    %v137 = vunpack.c.l.b16 %v67
    %v138 = vunpack.c.h.b16 %v67
    %v139 = vunpack.c.l.b16 %v68
    %v140 = vunpack.c.h.b16 %v68
    %v141 = vunpack.c.l.b16 %v69
    %v142 = vunpack.c.h.b16 %v69
    %v143 = vunpack.c.l.b16 %v70
    %v144 = vunpack.c.h.b16 %v70
    %v145 = vunpack.c.l.b16 %v71
    %v146 = vunpack.c.h.b16 %v71
    %v147 = vunpack.c.l.b16 %v72
    %v148 = vunpack.c.h.b16 %v72
    %v149 = vpack.c.b16 %v119, %v117
    %v150 = vpack.c.b16 %v120, %v118
    %v151 = vpack.c.b16 %v123, %v121
    %v152 = vpack.c.b16 %v124, %v122
    %v153 = vpack.c.b16 %v127, %v125
    %v154 = vpack.c.b16 %v128, %v126
    %v155 = vpack.c.b16 %v131, %v129
    %v156 = vpack.c.b16 %v132, %v130
    %v157 = vpack.c.b16 %v135, %v133
    %v158 = vpack.c.b16 %v136, %v134
    %v159 = vpack.c.b16 %v139, %v137
    %v160 = vpack.c.b16 %v140, %v138
    %v161 = vpack.c.b16 %v143, %v141
    %v162 = vpack.c.b16 %v144, %v142
    %v163 = vpack.c.b16 %v147, %v145
    %v164 = vpack.c.b16 %v148, %v146
    %181 = vmatprep.subr.bf16.mxu0 %v164
    %182 = vmatpush1.bf16.msra.mxu0 %v163
    %183 = vmatprep.subr.bf16.mxu0 %v162
    %184 = vmatpush1.bf16.msra.mxu0 %v161
    %185 = vmatprep.subr.bf16.mxu0 %v160
    %186 = vmatpush1.bf16.msra.mxu0 %v159
    %187 = vmatprep.subr.bf16.mxu0 %v158
    %188 = vmatpush1.bf16.msra.mxu0 %v157
    %189 = vmatprep.subr.bf16.mxu0 %v156
    %190 = vmatpush1.bf16.msra.mxu0 %v155
    %191 = vmatprep.subr.bf16.mxu0 %v154
    %192 = vmatpush1.bf16.msra.mxu0 %v153
    %193 = vmatprep.subr.bf16.mxu0 %v152
    %194 = vmatpush1.bf16.msra.mxu0 %v151
    %195 = vmatprep.subr.bf16.mxu0 %v150
    %196 = vmatpush1.bf16.msra.mxu0 %v149
    %197 = vmatprep.subr.bf16.mxu0 0
    %198 = vmatpush2.bf16.msra.mxu0 0
    %199 = vmatprep.subr.bf16.mxu0 0
    %200 = vmatpush2.bf16.msra.mxu0 0
    %201 = vmatprep.subr.bf16.mxu0 0
    %202 = vmatpush2.bf16.msra.mxu0 0
    %203 = vmatprep.subr.bf16.mxu0 0
    %204 = vmatpush2.bf16.msra.mxu0 0
    %205 = vmatprep.subr.bf16.mxu0 0
    %206 = vmatpush2.bf16.msra.mxu0 0
    %207 = vmatprep.subr.bf16.mxu0 0
    %208 = vmatpush2.bf16.msra.mxu0 0
    %209 = vmatprep.subr.bf16.mxu0 0
    %210 = vmatpush2.bf16.msra.mxu0 0
    %211 = vmatprep.subr.bf16.mxu0 0
    %212 = vmatpush2.bf16.msra.mxu0 0
    %213 = vmatprep.mubr.bf16.mxu0 0
    %214 = vmatmul.mubr.bf16.gmra.mxu0 %v56
    %v215 = vpop.f32.mrf.mxu0
    %v216 = vadd.f32 %v99, %v215
    %v217 = vpop.f32.mrf.mxu0
    %v218 = vadd.f32 %v100, %v217
    %v219 = vpop.f32.mrf.mxu0
    %v220 = vpop.f32.mrf.mxu0
    %221 = vdwg.mxu0
    %222 = vset.pattern.permute.xlu0 1
    %223 = vperm.xlu0 %222, %v73
    %v224 = vpop.permute.xlu0 %223
    %v226 = vlaneseq
    %v227 = vshrl.u32 %v226, 7
    %v228 = vsub.s32 1, %v227
    %v229 = vrot.slane %v74, %v228
    %v230 = vlaneseq
    %v231 = vshrl.u32 %v230, 7
    %v232 = vsub.s32 5, %v231
    %v233 = vrot.slane %v74, %v232
    %v236 = vlaneseq
    %v237 = vshrl.u32 %v236, 7
    %v238 = vsub.s32 1, %v237
    %v239 = vrot.slane %v229, %v238
    %v240 = vlaneseq
    %v241 = vshrl.u32 %v240, 7
    %v242 = vsub.s32 1, %v241
    %v243 = vrot.slane %v233, %v242
    %v244 = vmul.f32 %v224, %v239
    %v245 = vmul.f32 %v224, %v243
    %v246 = vadd.f32 %v216, %v244
    %v247 = vadd.f32 %v218, %v245
    %248 = vset.pattern.permute.xlu0 2
    %249 = vperm.xlu0 %248, %v73
    %v250 = vpop.permute.xlu0 %249
    %v252 = vlaneseq
    %v253 = vshrl.u32 %v252, 7
    %v254 = vsub.s32 2, %v253
    %v255 = vrot.slane %v74, %v254
    %v256 = vlaneseq
    %v257 = vshrl.u32 %v256, 7
    %v258 = vsub.s32 6, %v257
    %v259 = vrot.slane %v74, %v258
    %v262 = vlaneseq
    %v263 = vshrl.u32 %v262, 7
    %v264 = vsub.s32 2, %v263
    %v265 = vrot.slane %v255, %v264
    %v266 = vlaneseq
    %v267 = vshrl.u32 %v266, 7
    %v268 = vsub.s32 2, %v267
    %v269 = vrot.slane %v259, %v268
    %v270 = vmul.f32 %v250, %v265
    %v271 = vmul.f32 %v250, %v269
    %v272 = vadd.f32 %v246, %v270
    %v273 = vadd.f32 %v247, %v271
    %274 = vset.pattern.permute.xlu0 3
    %275 = vperm.xlu0 %274, %v73
    %v276 = vpop.permute.xlu0 %275
    %v278 = vlaneseq
    %v279 = vshrl.u32 %v278, 7
    %v280 = vsub.s32 3, %v279
    %v281 = vrot.slane %v74, %v280
    %v282 = vlaneseq
    %v283 = vshrl.u32 %v282, 7
    %v284 = vsub.s32 7, %v283
    %v285 = vrot.slane %v74, %v284
    %v288 = vlaneseq
    %v289 = vshrl.u32 %v288, 7
    %v290 = vsub.s32 3, %v289
    %v291 = vrot.slane %v281, %v290
    %v292 = vlaneseq
    %v293 = vshrl.u32 %v292, 7
    %v294 = vsub.s32 3, %v293
    %v295 = vrot.slane %v285, %v294
    %v296 = vmul.f32 %v276, %v291
    %v297 = vmul.f32 %v276, %v295
    %v298 = vadd.f32 %v272, %v296
    %v299 = vadd.f32 %v273, %v297
    %v300 = vld [vmem:[%s4] sm:$0x3]
    %v302 = vlaneseq
    %v303 = vshrl.u32 %v302, 7
    %v304 = vsub.s32 0, %v303
    %v305 = vrot.slane %v300, %v304
    %v306 = vlaneseq
    %v307 = vshrl.u32 %v306, 7
    %v308 = vsub.s32 1, %v307
    %v309 = vrot.slane %v300, %v308
    %v312 = vadd.f32 %v298, %v305
    %v313 = vadd.f32 %v299, %v309
    %v314 = vmax.f32 %v312, 0.0
    %v315 = vmax.f32 %v313, 0.0
    %v316 = vpack.c.bf16 %v314, %v314
    %v317 = vpack.c.bf16 %v315, %v315
    %v318 = vld [vmem:[#allocation4] sm:$0xf]
    %v319 = vld [vmem:[#allocation4 + $0x4] sm:$0xf]
    %v320 = vld [vmem:[#allocation4 + $0x8] sm:$0xf]
    %v321 = vld [vmem:[#allocation4 + $0xc] sm:$0xf]
    %v322 = vld [vmem:[#allocation4 + $0x10] sm:$0xf]
    %v323 = vld [vmem:[#allocation4 + $0x14] sm:$0xf]
    %v324 = vld [vmem:[#allocation4 + $0x18] sm:$0xf]
    %v325 = vld [vmem:[#allocation4 + $0x1c] sm:$0xf]
    %v326 = vld [vmem:[#allocation4 + $0x20] sm:$0xf]
    %v327 = vld [vmem:[#allocation4 + $0x24] sm:$0xf]
    %v328 = vld [vmem:[#allocation4 + $0x28] sm:$0xf]
    %v329 = vld [vmem:[#allocation4 + $0x2c] sm:$0xf]
    %v330 = vld [vmem:[#allocation4 + $0x30] sm:$0xf]
    %v331 = vld [vmem:[#allocation4 + $0x34] sm:$0xf]
    %v332 = vld [vmem:[#allocation4 + $0x38] sm:$0xf]
    %v333 = vld [vmem:[#allocation4 + $0x3c] sm:$0xf]
    %v334 = vld [vmem:[#allocation4 + $0x40] sm:$0xf]
    %v335 = vld [vmem:[#allocation4 + $0x44] sm:$0xf]
    %v336 = vld [vmem:[#allocation4 + $0x48] sm:$0xf]
    %v337 = vld [vmem:[#allocation4 + $0x4c] sm:$0xf]
    %v338 = vld [vmem:[#allocation4 + $0x50] sm:$0xf]
    %v339 = vld [vmem:[#allocation4 + $0x54] sm:$0xf]
    %v340 = vld [vmem:[#allocation4 + $0x58] sm:$0xf]
    %v341 = vld [vmem:[#allocation4 + $0x5c] sm:$0xf]
    %v342 = vld [vmem:[#allocation4 + $0x60] sm:$0xf]
    %v343 = vld [vmem:[#allocation4 + $0x64] sm:$0xf]
    %v344 = vld [vmem:[#allocation4 + $0x68] sm:$0xf]
    %v345 = vld [vmem:[#allocation4 + $0x6c] sm:$0xf]
    %v346 = vld [vmem:[#allocation4 + $0x70] sm:$0xf]
    %v347 = vld [vmem:[#allocation4 + $0x74] sm:$0xf]
    %v348 = vld [vmem:[#allocation4 + $0x78] sm:$0xf]
    %v349 = vld [vmem:[#allocation4 + $0x7c] sm:$0xf]
    %v350 = vld [vmem:[%s6] sm:$0x1]
    %v352 = vlaneseq
    %v353 = vshrl.u32 %v352, 7
    %v354 = vsub.s32 0, %v353
    %v355 = vrot.slane %v350, %v354
    %v389 = vunpack.c.l.b16 %v318
    %v390 = vunpack.c.l.b16 %v319
    %v391 = vunpack.c.l.b16 %v320
    %v392 = vunpack.c.l.b16 %v321
    %v393 = vunpack.c.l.b16 %v322
    %v394 = vunpack.c.l.b16 %v323
    %v395 = vunpack.c.l.b16 %v324
    %v396 = vunpack.c.l.b16 %v325
    %v397 = vunpack.c.l.b16 %v326
    %v398 = vunpack.c.l.b16 %v327
    %v399 = vunpack.c.l.b16 %v328
    %v400 = vunpack.c.l.b16 %v329
    %v401 = vunpack.c.l.b16 %v330
    %v402 = vunpack.c.l.b16 %v331
    %v403 = vunpack.c.l.b16 %v332
    %v404 = vunpack.c.l.b16 %v333
    %v405 = vunpack.c.l.b16 %v334
    %v406 = vunpack.c.l.b16 %v335
    %v407 = vunpack.c.l.b16 %v336
    %v408 = vunpack.c.l.b16 %v337
    %v409 = vunpack.c.l.b16 %v338
    %v410 = vunpack.c.l.b16 %v339
    %v411 = vunpack.c.l.b16 %v340
    %v412 = vunpack.c.l.b16 %v341
    %v413 = vunpack.c.l.b16 %v342
    %v414 = vunpack.c.l.b16 %v343
    %v415 = vunpack.c.l.b16 %v344
    %v416 = vunpack.c.l.b16 %v345
    %v417 = vunpack.c.l.b16 %v346
    %v418 = vunpack.c.l.b16 %v347
    %v419 = vunpack.c.l.b16 %v348
    %v420 = vunpack.c.l.b16 %v349
    %v421 = vpack.c.b16 %v390, %v389
    %v422 = vpack.c.b16 %v392, %v391
    %v423 = vpack.c.b16 %v394, %v393
    %v424 = vpack.c.b16 %v396, %v395
    %v425 = vpack.c.b16 %v398, %v397
    %v426 = vpack.c.b16 %v400, %v399
    %v427 = vpack.c.b16 %v402, %v401
    %v428 = vpack.c.b16 %v404, %v403
    %v429 = vpack.c.b16 %v406, %v405
    %v430 = vpack.c.b16 %v408, %v407
    %v431 = vpack.c.b16 %v410, %v409
    %v432 = vpack.c.b16 %v412, %v411
    %v433 = vpack.c.b16 %v414, %v413
    %v434 = vpack.c.b16 %v416, %v415
    %v435 = vpack.c.b16 %v418, %v417
    %v436 = vpack.c.b16 %v420, %v419
    %453 = vmatprep.subr.bf16.mxu0 0
    %454 = vmatpush1.bf16.msra.mxu0 %v428
    %455 = vmatprep.subr.bf16.mxu0 0
    %456 = vmatpush1.bf16.msra.mxu0 %v427
    %457 = vmatprep.subr.bf16.mxu0 0
    %458 = vmatpush1.bf16.msra.mxu0 %v426
    %459 = vmatprep.subr.bf16.mxu0 0
    %460 = vmatpush1.bf16.msra.mxu0 %v425
    %461 = vmatprep.subr.bf16.mxu0 0
    %462 = vmatpush1.bf16.msra.mxu0 %v424
    %463 = vmatprep.subr.bf16.mxu0 0
    %464 = vmatpush1.bf16.msra.mxu0 %v423
    %465 = vmatprep.subr.bf16.mxu0 0
    %466 = vmatpush1.bf16.msra.mxu0 %v422
    %467 = vmatprep.subr.bf16.mxu0 0
    %468 = vmatpush1.bf16.msra.mxu0 %v421
    %469 = vmatprep.subr.bf16.mxu0 0
    %470 = vmatpush2.bf16.msra.mxu0 %v436
    %471 = vmatprep.subr.bf16.mxu0 0
    %472 = vmatpush2.bf16.msra.mxu0 %v435
    %473 = vmatprep.subr.bf16.mxu0 0
    %474 = vmatpush2.bf16.msra.mxu0 %v434
    %475 = vmatprep.subr.bf16.mxu0 0
    %476 = vmatpush2.bf16.msra.mxu0 %v433
    %477 = vmatprep.subr.bf16.mxu0 0
    %478 = vmatpush2.bf16.msra.mxu0 %v432
    %479 = vmatprep.subr.bf16.mxu0 0
    %480 = vmatpush2.bf16.msra.mxu0 %v431
    %481 = vmatprep.subr.bf16.mxu0 0
    %482 = vmatpush2.bf16.msra.mxu0 %v430
    %483 = vmatprep.subr.bf16.mxu0 0
    %484 = vmatpush2.bf16.msra.mxu0 %v429
    %485 = vmatprep.mubr.bf16.mxu0 %v317
    %486 = vmatmul.mubr.bf16.gmra.mxu0 %v316
    %v487 = vpop.f32.mrf.mxu0
    %v488 = vadd.f32 %v355, %v487
    %v489 = vpop.f32.mrf.mxu0
    %v490 = vpop.f32.mrf.mxu0
    %v491 = vpop.f32.mrf.mxu0
    %492 = vdwg.mxu0
    %v493 = vmax.f32 %v488, -30.0
    %v494 = vmin.f32 %v493, 30.0
    %v495 = vsub.f32 0.0, %v494
    %v496 = vmul.f32 %v495, 1.442695
    %v497 = vpow.pop %v496
    %v498 = vadd.f32 %v497, 1.0
    %v499 = vrcp.pop %v498
    %500 = vst [vmem:[%s7] sm:$0xff] %v499
    // Predicated region
    $region38: #{_critique_head_impl.1} parent=1 // pred_check
      _
    $region39: #{_critique_head_impl.1} parent=1 // pred_check_branch
      %502 = sbr.rel (0) target = $region41
    $region40: #{_critique_head_impl.1} parent=1 // pred_region
      _
    $region41: #{_critique_head_impl.1} parent=1 // pred_fallthru
      _
    // Predicated region
    $region42: #{_critique_head_impl.1} parent=1 // pred_check
      _
    $region43: #{_critique_head_impl.1} parent=1 // pred_check_branch
      %504 = sbr.rel (0) target = $region45
    $region44: #{_critique_head_impl.1} parent=1 // pred_region
      _
    $region45: #{_critique_head_impl.1} parent=1 // pred_fallthru
      _
    %505 = vsyncpa [#allocation3], 1
    %506 = vsyncpa [#allocation5], 1

</llo_original>
